<compile_context>
chip_gen: v6e
topology: v6e:2x2x1
jax: 0.10.0
libtpu: 0.0.40
codegen_flags: <defaults>
</compile_context>

<pallas_src>
import functools

import jax
import jax.numpy as jnp
from jax.experimental import pallas as pl
from jax.experimental.pallas import tpu as pltpu


def _round_up(n, m):
    return ((n + m - 1) // m) * m


def decoder_kernel(x_ref, w_ref, b_ref, out_ref, *,
                   B, L, k_size, c0, size_pad, l_max, front):
    """Whole-batch decoder forward on a flat (B*l_max, C) row canvas."""
    f32 = jnp.float32
    KC = k_size * 128
    R = B * l_max

    # Per-batch local row index, built once (2-D sublane iota + aligned tile).
    lidx = jnp.tile(jax.lax.broadcasted_iota(jnp.int32, (l_max, 128), 0), (B, 1))

    def masked_bias(bias, l_real):
        # Bias broadcast over real rows only; padded rows stay exactly zero so
        # the whole-batch shifted-tap adds never leak data across batches.
        if l_real >= l_max:
            return jnp.broadcast_to(bias, (R, 128))
        return jnp.where(lidx < l_real, bias, 0.0)

    # ---- Linear(4nf -> 3nf, padded to 128 lanes) + ReLU --------------------
    h = jnp.dot(x_ref[...], w_ref[0:c0, 0:128], preferred_element_type=f32)
    h = jnp.maximum(h + masked_bias(b_ref[0:1, 0:128], L), 0.0)

    # ---- fused-tap ConvTranspose1d (stride 1, pad 0) + ReLU -----------------
    # One MXU push covers all k taps (tap q sits in 128-aligned columns); the
    # shifted adds are static slices of the result -> pure vreg work, no VMEM
    # scratch and no masked read-modify-write stores.
    def convt_relu(h_in, row_off, bias, l_out_real):
        h_ext = jnp.concatenate(
            [jnp.zeros((front, 128), f32), h_in], axis=0)        # aligned prepend
        P = jnp.dot(h_ext, w_ref[row_off:row_off + 128, 0:KC],
                    preferred_element_type=f32)                   # (front+R, k*128)
        acc = masked_bias(bias, l_out_real)
        for q in range(k_size):
            # input row (t - q) contributes to output row t; rows pulled from
            # the front pad / previous batch's tail are guaranteed zero.
            acc = acc + P[front - q:front - q + R, q * 128:(q + 1) * 128]
        return jnp.maximum(acc, 0.0)

    L1 = L + (k_size - 1)
    L2 = L1 + (k_size - 1)
    L3 = L2 + (k_size - 1)
    h = convt_relu(h, c0, b_ref[1:2, 0:128], L1)          # -> 2*nf (in 128 lanes)
    h = convt_relu(h, c0 + 128, b_ref[2:3, 0:128], L2)    # ->   nf (in 128 lanes)
    h = convt_relu(h, c0 + 256, b_ref[3:4, 0:128], L3)    # ->  128

    # ---- Linear(128 -> size_pad): lane-dense, unmasked store ----------------
    y = jnp.dot(h, w_ref[c0 + 384:c0 + 512, 0:size_pad],
                preferred_element_type=f32) + b_ref[4:5, 0:size_pad]
    out_ref[...] = y.astype(out_ref.dtype)


def pack_params(params, *, num_filters, k_size, size):
    """Pack all decoder weights/biases into two pre-padded slabs.

    Called ONCE (hoisted out of the per-call forward path): one weight slab and
    one bias slab replace 11 per-call parameter DMAs, and every conv tap lands
    in its own 128-aligned column slot so all in-kernel slices are aligned.
    """
    w1, b1, wt1, bt1, wt2, bt2, wt3, bt3, w2, b2 = params
    nf = num_filters
    assert 3 * nf <= 128, "kernel packs intermediate channels into 128 lanes"

    c0 = _round_up(4 * nf, 8)
    size_pad = _round_up(size, 128)
    cw = max(k_size * 128, size_pad)
    bw = max(128, size_pad)

    def stack_taps(wt):
        # (k, Cin, Cout) -> (128, k*128); Cin rows and per-tap Cout columns are
        # zero-padded so tap q sits at column offset q*128.
        k, cin, cout = wt.shape
        s = jnp.zeros((128, k * 128), jnp.float32)
        for q in range(k):
            s = s.at[:cin, q * 128:q * 128 + cout].set(wt[q])
        return s

    w_slab = jnp.zeros((c0 + 4 * 128, cw), jnp.float32)
    w_slab = w_slab.at[0:w1.shape[0], 0:w1.shape[1]].set(w1)
    w_slab = w_slab.at[c0:c0 + 128, 0:k_size * 128].set(stack_taps(wt1))
    w_slab = w_slab.at[c0 + 128:c0 + 256, 0:k_size * 128].set(stack_taps(wt2))
    w_slab = w_slab.at[c0 + 256:c0 + 384, 0:k_size * 128].set(stack_taps(wt3))
    w_slab = w_slab.at[c0 + 384:c0 + 512, 0:size].set(w2)

    b_slab = jnp.zeros((8, bw), jnp.float32)
    b_slab = b_slab.at[0, 0:b1.shape[1]].set(b1[0])
    b_slab = b_slab.at[1, 0:bt1.shape[1]].set(bt1[0])
    b_slab = b_slab.at[2, 0:bt2.shape[1]].set(bt2[0])
    b_slab = b_slab.at[3, 0:bt3.shape[1]].set(bt3[0])
    b_slab = b_slab.at[4, 0:size].set(b2[0])
    return w_slab, b_slab


@functools.partial(jax.jit, static_argnames=("num_filters", "k_size", "size"))
def decoder_forward(x, w_slab, b_slab, *, num_filters, k_size, size):
    """x: (B, L, 4*nf) float32 -> (B, L + 3*(k_size-1), size)."""
    B, L, cx = x.shape
    nf = num_filters
    c0 = _round_up(4 * nf, 8)
    size_pad = _round_up(size, 128)
    L3 = L + 3 * (k_size - 1)
    l_max = _round_up(L3, 8)                 # shared padded per-batch length
    front = _round_up(max(k_size - 1, 1), 8)
    R = B * l_max

    # Zero-pad x into the flat (B*l_max, c0) canvas; padded rows/channels must
    # be exactly zero (the kernel relies on it for batch-safe tap shifts).
    xp = jnp.zeros((B, l_max, c0), jnp.float32).at[:, :L, :cx].set(x)
    xp = xp.reshape(R, c0)

    kernel = functools.partial(
        decoder_kernel, B=B, L=L, k_size=k_size, c0=c0,
        size_pad=size_pad, l_max=l_max, front=front)

    out = pl.pallas_call(
        kernel,
        out_shape=jax.ShapeDtypeStruct((R, size_pad), jnp.float32),
        grid=(1,),
        in_specs=[pl.BlockSpec((R, c0), lambda i: (0, 0)),
                  pl.BlockSpec(w_slab.shape, lambda i: (0, 0)),
                  pl.BlockSpec(b_slab.shape, lambda i: (0, 0))],
        out_specs=pl.BlockSpec((R, size_pad), lambda i: (0, 0)),
        compiler_params=pltpu.CompilerParams(
            dimension_semantics=("arbitrary",)),
    )(xp, w_slab, b_slab)

    # TODO(synk): at production B/L, add a "parallel" batch-tile grid axis
    # (v7x megacore), re-budget tiles for the 64 MiB VMEM, and feed bf16 into
    # the matmuls while keeping f32 accumulation.
    return out.reshape(B, l_max, size_pad)[:, :L3, :size]


def make_params(key, num_filters, k_size, size):
    """Deterministic synthetic parameters matching the PyTorch module shapes."""
    nf = num_filters
    ks = jax.random.split(key, 10)
    scale = 0.1

    def nrm(k, shape):
        return (scale * jax.random.normal(k, shape)).astype(jnp.float32)

    # Linear(4nf -> 3nf): stored (in, out) for right-multiplication
    w1 = nrm(ks[0], (4 * nf, 3 * nf))
    b1 = nrm(ks[1], (1, 3 * nf))
    # ConvTranspose1d weights, PyTorch (Cin, Cout, k) pre-transposed to (k, Cin, Cout)
    wt1 = nrm(ks[2], (k_size, 3 * nf, 2 * nf))
    bt1 = nrm(ks[3], (1, 2 * nf))
    wt2 = nrm(ks[4], (k_size, 2 * nf, nf))
    bt2 = nrm(ks[5], (1, nf))
    wt3 = nrm(ks[6], (k_size, nf, 128))
    bt3 = nrm(ks[7], (1, 128))
    # Linear(128 -> size)
    w2 = nrm(ks[8], (128, size))
    b2 = nrm(ks[9], (1, size))
    return (w1, b1, wt1, bt1, wt2, bt2, wt3, bt3, w2, b2)


def ref_forward(x, params, k_size):
    """Pure-JAX reference with identical semantics (sanity check)."""
    w1, b1, wt1, bt1, wt2, bt2, wt3, bt3, w2, b2 = params
    h = jax.nn.relu(x @ w1 + b1)

    def convt(h, w, b):
        B, L, _ = h.shape
        k = w.shape[0]
        Lout = L + k - 1
        y = jnp.zeros((B, Lout, w.shape[2]), jnp.float32) + b
        for p in range(k):
            y = y.at[:, p:p + L, :].add(h @ w[p])
        return jax.nn.relu(y)

    h = convt(h, wt1, bt1)
    h = convt(h, wt2, bt2)
    h = convt(h, wt3, bt3)
    return h @ w2 + b2


if __name__ == "__main__":
    # Small shapes consistent with the module's forward: x is (B, L, num_filters*4)
    B, L = 2, 8
    num_filters = 8            # -> input channels 32
    k_size = 3
    size = 20
    init_dim = 16              # unused by forward (as in the PyTorch module)

    key = jax.random.PRNGKey(0)
    k_x, k_p = jax.random.split(key)
    x = jax.random.normal(k_x, (B, L, num_filters * 4), dtype=jnp.float32)
    params = make_params(k_p, num_filters, k_size, size)

    # Parameter packing is hoisted: done once, outside the forward path.
    w_slab, b_slab = pack_params(params, num_filters=num_filters,
                                 k_size=k_size, size=size)

    out = decoder_forward(x, w_slab, b_slab, num_filters=num_filters,
                          k_size=k_size, size=size)
    out = jax.block_until_ready(out)

    expected_shape = (B, L + 3 * (k_size - 1), size)
    assert out.shape == expected_shape, (out.shape, expected_shape)

    ref = jax.block_until_ready(ref_forward(x, params, k_size))
    assert jnp.allclose(out, ref, atol=1e-3, rtol=1e-3), float(
        jnp.max(jnp.abs(out - ref)))

    print("KERNEL_OK")
</pallas_src>

<mosaic_0001>
module attributes {stable_mosaic.version = 11 : i64} {
  func.func @decoder_kernel(%arg0: i32, %arg1: memref<32x32xf32, #tpu.memory_space<vmem>>, %arg2: memref<544x384xf32, #tpu.memory_space<vmem>>, %arg3: memref<8x128xf32, #tpu.memory_space<vmem>>, %arg4: memref<32x128xf32, #tpu.memory_space<vmem>>) attributes {dimension_semantics = [#tpu.dimension_semantics<arbitrary>], iteration_bounds = array<i64: 1>, scalar_prefetch = 0 : i64, scratch_operands = 0 : i64, tpu.core_type = #tpu.core_type<tc>, window_params = [{pipeline_mode = #tpu.pipeline_mode<synchronous>, transform_indices = @transform_0, window_bounds = array<i64: 32, 32>}, {pipeline_mode = #tpu.pipeline_mode<synchronous>, transform_indices = @transform_1, window_bounds = array<i64: 544, 384>}, {pipeline_mode = #tpu.pipeline_mode<synchronous>, transform_indices = @transform_2, window_bounds = array<i64: 8, 128>}, {pipeline_mode = #tpu.pipeline_mode<synchronous>, transform_indices = @transform_3, window_bounds = array<i64: 32, 128>}]} {
    %0 = tpu.iota {dimensions = array<i32: 0>} : vector<16x128xi32>
    %1 = tpu.concatenate %0, %0 in 0 : vector<16x128xi32>, vector<16x128xi32> -> vector<32x128xi32>
    %c0 = arith.constant 0 : index
    %c0_0 = arith.constant 0 : index
    %2 = vector.load %arg1[%c0, %c0_0] : memref<32x32xf32, #tpu.memory_space<vmem>>, vector<32x32xf32>
    %c0_1 = arith.constant 0 : index
    %c0_2 = arith.constant 0 : index
    %3 = vector.load %arg2[%c0_1, %c0_2] : memref<544x384xf32, #tpu.memory_space<vmem>>, vector<32x128xf32>
    %cst = arith.constant dense<0.000000e+00> : vector<32x128xf32>
    %4 = tpu.matmul %2, %3, %cst {dimension_numbers = #tpu.dot_dimension_numbers<[1], [0], [0], [1], [0, 0, 1, 1], [], []>} : vector<32x32xf32>, vector<32x128xf32>, vector<32x128xf32> -> vector<32x128xf32>
    %c0_3 = arith.constant 0 : index
    %c0_4 = arith.constant 0 : index
    %5 = vector.load %arg3[%c0_3, %c0_4] : memref<8x128xf32, #tpu.memory_space<vmem>>, vector<1x128xf32>
    %c8_i32 = arith.constant 8 : i32
    %6 = vector.broadcast %c8_i32 : i32 to vector<32x128xi32>
    %7 = arith.cmpi slt, %1, %6 : vector<32x128xi32>
    %cst_5 = arith.constant 0.000000e+00 : f32
    %8 = vector.shape_cast %5 : vector<1x128xf32> to vector<1x128xf32>
    %9 = vector.broadcast %8 : vector<1x128xf32> to vector<32x128xf32>
    %10 = vector.broadcast %cst_5 : f32 to vector<32x128xf32>
    %11 = arith.select %7, %9, %10 : vector<32x128xi1>, vector<32x128xf32>
    %12 = arith.addf %4, %11 : vector<32x128xf32>
    %cst_6 = arith.constant 0.000000e+00 : f32
    %13 = vector.broadcast %cst_6 : f32 to vector<32x128xf32>
    %14 = arith.maximumf %12, %13 : vector<32x128xf32>
    %c1 = arith.constant 1 : index
    %c0_7 = arith.constant 0 : index
    %15 = vector.load %arg3[%c1, %c0_7] : memref<8x128xf32, #tpu.memory_space<vmem>>, vector<1x128xf32>
    %cst_8 = arith.constant 0.000000e+00 : f32
    %16 = vector.broadcast %cst_8 : f32 to vector<8x128xf32>
    %17 = tpu.concatenate %16, %14 in 0 : vector<8x128xf32>, vector<32x128xf32> -> vector<40x128xf32>
    %c32 = arith.constant 32 : index
    %c0_9 = arith.constant 0 : index
    %18 = vector.load %arg2[%c32, %c0_9] : memref<544x384xf32, #tpu.memory_space<vmem>>, vector<128x384xf32>
    %cst_10 = arith.constant dense<0.000000e+00> : vector<40x384xf32>
    %19 = tpu.matmul %17, %18, %cst_10 {dimension_numbers = #tpu.dot_dimension_numbers<[1], [0], [0], [1], [0, 0, 1, 1], [], []>} : vector<40x128xf32>, vector<128x384xf32>, vector<40x384xf32> -> vector<40x384xf32>
    %c10_i32 = arith.constant 10 : i32
    %20 = vector.broadcast %c10_i32 : i32 to vector<32x128xi32>
    %21 = arith.cmpi slt, %1, %20 : vector<32x128xi32>
    %cst_11 = arith.constant 0.000000e+00 : f32
    %22 = vector.shape_cast %15 : vector<1x128xf32> to vector<1x128xf32>
    %23 = vector.broadcast %22 : vector<1x128xf32> to vector<32x128xf32>
    %24 = vector.broadcast %cst_11 : f32 to vector<32x128xf32>
    %25 = arith.select %21, %23, %24 : vector<32x128xi1>, vector<32x128xf32>
    %26 = vector.extract_strided_slice %19 {offsets = [8, 0], sizes = [32, 128], strides = [1, 1]} : vector<40x384xf32> to vector<32x128xf32>
    %27 = arith.addf %25, %26 : vector<32x128xf32>
    %28 = vector.extract_strided_slice %19 {offsets = [7, 128], sizes = [32, 128], strides = [1, 1]} : vector<40x384xf32> to vector<32x128xf32>
    %29 = arith.addf %27, %28 : vector<32x128xf32>
    %30 = vector.extract_strided_slice %19 {offsets = [6, 256], sizes = [32, 128], strides = [1, 1]} : vector<40x384xf32> to vector<32x128xf32>
    %31 = arith.addf %29, %30 : vector<32x128xf32>
    %cst_12 = arith.constant 0.000000e+00 : f32
    %32 = vector.broadcast %cst_12 : f32 to vector<32x128xf32>
    %33 = arith.maximumf %31, %32 : vector<32x128xf32>
    %c2 = arith.constant 2 : index
    %c0_13 = arith.constant 0 : index
    %34 = vector.load %arg3[%c2, %c0_13] : memref<8x128xf32, #tpu.memory_space<vmem>>, vector<1x128xf32>
    %cst_14 = arith.constant 0.000000e+00 : f32
    %35 = vector.broadcast %cst_14 : f32 to vector<8x128xf32>
    %36 = tpu.concatenate %35, %33 in 0 : vector<8x128xf32>, vector<32x128xf32> -> vector<40x128xf32>
    %c160 = arith.constant 160 : index
    %c0_15 = arith.constant 0 : index
    %37 = vector.load %arg2[%c160, %c0_15] : memref<544x384xf32, #tpu.memory_space<vmem>>, vector<128x384xf32>
    %cst_16 = arith.constant dense<0.000000e+00> : vector<40x384xf32>
    %38 = tpu.matmul %36, %37, %cst_16 {dimension_numbers = #tpu.dot_dimension_numbers<[1], [0], [0], [1], [0, 0, 1, 1], [], []>} : vector<40x128xf32>, vector<128x384xf32>, vector<40x384xf32> -> vector<40x384xf32>
    %c12_i32 = arith.constant 12 : i32
    %39 = vector.broadcast %c12_i32 : i32 to vector<32x128xi32>
    %40 = arith.cmpi slt, %1, %39 : vector<32x128xi32>
    %cst_17 = arith.constant 0.000000e+00 : f32
    %41 = vector.shape_cast %34 : vector<1x128xf32> to vector<1x128xf32>
    %42 = vector.broadcast %41 : vector<1x128xf32> to vector<32x128xf32>
    %43 = vector.broadcast %cst_17 : f32 to vector<32x128xf32>
    %44 = arith.select %40, %42, %43 : vector<32x128xi1>, vector<32x128xf32>
    %45 = vector.extract_strided_slice %38 {offsets = [8, 0], sizes = [32, 128], strides = [1, 1]} : vector<40x384xf32> to vector<32x128xf32>
    %46 = arith.addf %44, %45 : vector<32x128xf32>
    %47 = vector.extract_strided_slice %38 {offsets = [7, 128], sizes = [32, 128], strides = [1, 1]} : vector<40x384xf32> to vector<32x128xf32>
    %48 = arith.addf %46, %47 : vector<32x128xf32>
    %49 = vector.extract_strided_slice %38 {offsets = [6, 256], sizes = [32, 128], strides = [1, 1]} : vector<40x384xf32> to vector<32x128xf32>
    %50 = arith.addf %48, %49 : vector<32x128xf32>
    %cst_18 = arith.constant 0.000000e+00 : f32
    %51 = vector.broadcast %cst_18 : f32 to vector<32x128xf32>
    %52 = arith.maximumf %50, %51 : vector<32x128xf32>
    %c3 = arith.constant 3 : index
    %c0_19 = arith.constant 0 : index
    %53 = vector.load %arg3[%c3, %c0_19] : memref<8x128xf32, #tpu.memory_space<vmem>>, vector<1x128xf32>
    %cst_20 = arith.constant 0.000000e+00 : f32
    %54 = vector.broadcast %cst_20 : f32 to vector<8x128xf32>
    %55 = tpu.concatenate %54, %52 in 0 : vector<8x128xf32>, vector<32x128xf32> -> vector<40x128xf32>
    %c288 = arith.constant 288 : index
    %c0_21 = arith.constant 0 : index
    %56 = vector.load %arg2[%c288, %c0_21] : memref<544x384xf32, #tpu.memory_space<vmem>>, vector<128x384xf32>
    %cst_22 = arith.constant dense<0.000000e+00> : vector<40x384xf32>
    %57 = tpu.matmul %55, %56, %cst_22 {dimension_numbers = #tpu.dot_dimension_numbers<[1], [0], [0], [1], [0, 0, 1, 1], [], []>} : vector<40x128xf32>, vector<128x384xf32>, vector<40x384xf32> -> vector<40x384xf32>
    %c14_i32 = arith.constant 14 : i32
    %58 = vector.broadcast %c14_i32 : i32 to vector<32x128xi32>
    %59 = arith.cmpi slt, %1, %58 : vector<32x128xi32>
    %cst_23 = arith.constant 0.000000e+00 : f32
    %60 = vector.shape_cast %53 : vector<1x128xf32> to vector<1x128xf32>
    %61 = vector.broadcast %60 : vector<1x128xf32> to vector<32x128xf32>
    %62 = vector.broadcast %cst_23 : f32 to vector<32x128xf32>
    %63 = arith.select %59, %61, %62 : vector<32x128xi1>, vector<32x128xf32>
    %64 = vector.extract_strided_slice %57 {offsets = [8, 0], sizes = [32, 128], strides = [1, 1]} : vector<40x384xf32> to vector<32x128xf32>
    %65 = arith.addf %63, %64 : vector<32x128xf32>
    %66 = vector.extract_strided_slice %57 {offsets = [7, 128], sizes = [32, 128], strides = [1, 1]} : vector<40x384xf32> to vector<32x128xf32>
    %67 = arith.addf %65, %66 : vector<32x128xf32>
    %68 = vector.extract_strided_slice %57 {offsets = [6, 256], sizes = [32, 128], strides = [1, 1]} : vector<40x384xf32> to vector<32x128xf32>
    %69 = arith.addf %67, %68 : vector<32x128xf32>
    %cst_24 = arith.constant 0.000000e+00 : f32
    %70 = vector.broadcast %cst_24 : f32 to vector<32x128xf32>
    %71 = arith.maximumf %69, %70 : vector<32x128xf32>
    %c416 = arith.constant 416 : index
    %c0_25 = arith.constant 0 : index
    %72 = vector.load %arg2[%c416, %c0_25] : memref<544x384xf32, #tpu.memory_space<vmem>>, vector<128x128xf32>
    %cst_26 = arith.constant dense<0.000000e+00> : vector<32x128xf32>
    %73 = tpu.matmul %71, %72, %cst_26 {dimension_numbers = #tpu.dot_dimension_numbers<[1], [0], [0], [1], [0, 0, 1, 1], [], []>} : vector<32x128xf32>, vector<128x128xf32>, vector<32x128xf32> -> vector<32x128xf32>
    %c4 = arith.constant 4 : index
    %c0_27 = arith.constant 0 : index
    %74 = vector.load %arg3[%c4, %c0_27] : memref<8x128xf32, #tpu.memory_space<vmem>>, vector<1x128xf32>
    %75 = vector.broadcast %74 : vector<1x128xf32> to vector<32x128xf32>
    %76 = arith.addf %73, %75 : vector<32x128xf32>
    %c0_28 = arith.constant 0 : index
    %c0_29 = arith.constant 0 : index
    %77 = vector.load %arg4[%c0_28, %c0_29] : memref<32x128xf32, #tpu.memory_space<vmem>>, vector<32x128xf32>
    tpu.vector_store %arg4[%c0_28, %c0_29], %76 {strides = array<i32>} : memref<32x128xf32, #tpu.memory_space<vmem>>, vector<32x128xf32>,
    return
  }
  func.func @transform_0(%arg0: i32) -> (i32, i32) {
    %c0_i32 = arith.constant 0 : i32
    %c0_i32_0 = arith.constant 0 : i32
    %c0_i32_1 = arith.constant 0 : i32
    return %c0_i32, %c0_i32_0 : i32, i32
  }
  func.func @transform_1(%arg0: i32) -> (i32, i32) {
    %c0_i32 = arith.constant 0 : i32
    %c0_i32_0 = arith.constant 0 : i32
    %c0_i32_1 = arith.constant 0 : i32
    return %c0_i32, %c0_i32_0 : i32, i32
  }
  func.func @transform_2(%arg0: i32) -> (i32, i32) {
    %c0_i32 = arith.constant 0 : i32
    %c0_i32_0 = arith.constant 0 : i32
    %c0_i32_1 = arith.constant 0 : i32
    return %c0_i32, %c0_i32_0 : i32, i32
  }
  func.func @transform_3(%arg0: i32) -> (i32, i32) {
    %c0_i32 = arith.constant 0 : i32
    %c0_i32_0 = arith.constant 0 : i32
    %c0_i32_1 = arith.constant 0 : i32
    return %c0_i32, %c0_i32_0 : i32, i32
  }
}

</mosaic_0001>

<llo_original>
// kernel: decoder_forward.1
$region0: #{decoder_forward.1}
  #allocation0 [shape = 'u32[]', space=smem, size = 0x4, offset = 0x4, fixed_abs, tag = 'smem constant byte address 0x4 - core index']
  #allocation1 [shape = 'u32[144,128]{1,0:T(1,128)}', space=vmem, size = 0x12000, scoped, tag = 'internal scratch']
  %s0 = inlined_call_operand.vmem [shape: f32[32,32], index: 0, kind: input, shape index: {}]
  %s1 = inlined_call_operand.hbm [shape: f32[544,384], index: 1, kind: input, shape index: {}]
  %s2 = inlined_call_operand.vmem [shape: f32[8,128], index: 2, kind: input, shape index: {}]
  %s3 = inlined_call_operand.vmem [shape: f32[32,128], index: 3, kind: output, shape index: {}]
  %s4 = sld [smem:[#allocation0]]
  $region26: #{decoder_forward.1} parent=0
    _
  %s6 = ssub.s32 1, %s4
  %s7 = scalar_select 0, %s6, %s4
  $region1: #{decoder_forward.1} parent=0
    #allocation2 [shape = 'u8[835584]{0}', space=vmem, size = 0xcc000, scoped, tag = 'input window, operand 1, single buffered']
    #allocation3 [shape = 's32[1]{0}', space=sflag, size = 0x4, scoped, tag = 'scoped memory for decoder_forward.1']
    %8 = vsyncpa [#allocation3], 0
    // Predicated region
    $region2: #{decoder_forward.1} parent=1 // pred_check
      _
    $region3: #{decoder_forward.1} parent=1 // pred_check_branch
      %10 = sbr.rel (0) target = $region5
    $region4: #{decoder_forward.1} parent=1 // pred_region
      _
    $region5: #{decoder_forward.1} parent=1 // pred_fallthru
      _
    // Predicated region
    $region6: #{decoder_forward.1} parent=1 // pred_check
      _
    $region7: #{decoder_forward.1} parent=1 // pred_check_branch
      %12 = sbr.rel (0) target = $region9
    $region8: #{decoder_forward.1} parent=1 // pred_region
      %s14 = ssub.s32 26112, 26112
      %15 = vsyncadd [#allocation3], %s14
      %s16 = sshll.u32 [#allocation2], 4
      %s17 = int_to_ptr.vmem [resolvable:$true] %s16
      %22 = dma.hbm_to_vmem [thread:$0]  %s1, 26112, %s17, [#allocation3], 384, 384, 24
    $region9: #{decoder_forward.1} parent=1 // pred_fallthru
      _
    // Predicated region
    $region10: #{decoder_forward.1} parent=1 // pred_check
      _
    $region11: #{decoder_forward.1} parent=1 // pred_check_branch
      %24 = sbr.rel (0) target = $region13
    $region12: #{decoder_forward.1} parent=1 // pred_region
      _
    $region13: #{decoder_forward.1} parent=1 // pred_fallthru
      _
    // Predicated region
    $region14: #{decoder_forward.1} parent=1 // pred_check
      _
    $region15: #{decoder_forward.1} parent=1 // pred_check_branch
      %26 = sbr.rel (0) target = $region17
    $region16: #{decoder_forward.1} parent=1 // pred_region
      %27 = dma.done [#allocation3], 26112
    $region17: #{decoder_forward.1} parent=1 // pred_fallthru
      _
    %v28 = vlaneseq
    %v29 = vshrl.u32 %v28, 7
    %v30 = vadd.s32 %v29, 8
    %v31 = vld [vmem:[%s0] sm:$0xff]
    %v32 = vld [vmem:[%s0 + $0x8] sm:$0xff]
    %v33 = vld [vmem:[%s0 + $0x10] sm:$0xff]
    %v34 = vld [vmem:[%s0 + $0x18] sm:$0xff]
    %v35 = vld [vmem:[#allocation2] sm:$0xff]
    %v36 = vld [vmem:[#allocation2 + $0x18] sm:$0xff]
    %v37 = vld [vmem:[#allocation2 + $0x30] sm:$0xff]
    %v38 = vld [vmem:[#allocation2 + $0x48] sm:$0xff]
    %v39 = vld [vmem:[%s2] sm:$0x1]
    %vm40 = vcmp.lt.s32.totalorder %v29, 8
    %vm41 = vcmp.lt.s32.totalorder %v30, 8
    %v42 = vlaneseq
    %v43 = vshrl.u32 %v42, 7
    %v44 = vsub.s32 0, %v43
    %v45 = vrot.slane %v39, %v44
    %v46 = vsel %vm40, %v45, 0.0
    %v47 = vsel %vm41, %v45, 0.0
    %vm48 = vcmask 261120
    %v50 = vsel %vm48, %v31, 0
    %v53 = vsel %vm48, %v32, 0
    %v56 = vsel %vm48, %v33, 0
    %v59 = vsel %vm48, %v34, 0
    %61 = vmatprep.subr.mxu0 0.0
    %62 = vmatpush1.msra.mxu0 0.0
    %63 = vmatprep.subr.mxu0 0.0
    %64 = vmatpush1.msra.mxu0 0.0
    %65 = vmatprep.subr.mxu0 0.0
    %66 = vmatpush1.msra.mxu0 0.0
    %67 = vmatprep.subr.mxu0 0.0
    %68 = vmatpush1.msra.mxu0 0.0
    %69 = vmatprep.subr.mxu0 0.0
    %70 = vmatpush1.msra.mxu0 0.0
    %71 = vmatprep.subr.mxu0 0.0
    %72 = vmatpush1.msra.mxu0 0.0
    %73 = vmatprep.subr.mxu0 0.0
    %74 = vmatpush1.msra.mxu0 0.0
    %75 = vmatprep.subr.mxu0 0.0
    %76 = vmatpush1.msra.mxu0 0.0
    %77 = vmatprep.subr.mxu0 0.0
    %78 = vmatpush1.msra.mxu0 0.0
    %79 = vmatprep.subr.mxu0 0.0
    %80 = vmatpush1.msra.mxu0 0.0
    %81 = vmatprep.subr.mxu0 0.0
    %82 = vmatpush1.msra.mxu0 0.0
    %83 = vmatprep.subr.mxu0 0.0
    %84 = vmatpush1.msra.mxu0 0.0
    %85 = vmatprep.subr.mxu0 0.0
    %86 = vmatpush1.msra.mxu0 %v38
    %87 = vmatprep.subr.mxu0 0.0
    %88 = vmatpush1.msra.mxu0 %v37
    %89 = vmatprep.subr.mxu0 0.0
    %90 = vmatpush1.msra.mxu0 %v36
    %91 = vmatprep.subr.mxu0 0.0
    %92 = vmatpush1.msra.mxu0 %v35
    %93 = vmatprep.subr.mxu0 0.0
    %94 = vmatpush2.msra.mxu0 0.0
    %95 = vmatprep.subr.mxu0 0.0
    %96 = vmatpush2.msra.mxu0 0.0
    %97 = vmatprep.subr.mxu0 0.0
    %98 = vmatpush2.msra.mxu0 0.0
    %99 = vmatprep.subr.mxu0 0.0
    %100 = vmatpush2.msra.mxu0 0.0
    %101 = vmatprep.subr.mxu0 0.0
    %102 = vmatpush2.msra.mxu0 0.0
    %103 = vmatprep.subr.mxu0 0.0
    %104 = vmatpush2.msra.mxu0 0.0
    %105 = vmatprep.subr.mxu0 0.0
    %106 = vmatpush2.msra.mxu0 0.0
    %107 = vmatprep.subr.mxu0 0.0
    %108 = vmatpush2.msra.mxu0 0.0
    %109 = vmatprep.subr.mxu0 0.0
    %110 = vmatpush2.msra.mxu0 0.0
    %111 = vmatprep.subr.mxu0 0.0
    %112 = vmatpush2.msra.mxu0 0.0
    %113 = vmatprep.subr.mxu0 0.0
    %114 = vmatpush2.msra.mxu0 0.0
    %115 = vmatprep.subr.mxu0 0.0
    %116 = vmatpush2.msra.mxu0 0.0
    %117 = vmatprep.subr.mxu0 0.0
    %118 = vmatpush2.msra.mxu0 0.0
    %119 = vmatprep.subr.mxu0 0.0
    %120 = vmatpush2.msra.mxu0 0.0
    %121 = vmatprep.subr.mxu0 0.0
    %122 = vmatpush2.msra.mxu0 0.0
    %123 = vmatprep.subr.mxu0 0.0
    %124 = vmatpush2.msra.mxu0 0.0
    %125 = vmatprep.mubr.f32.mxu0 0.0
    %126 = vmatmul.mubr.f32.gmra.mxu0 %v50
    %v127 = vpop.f32.mrf.mxu0
    %v128 = vadd.f32 %v46, %v127
    %v129 = vpop.f32.mrf.mxu0
    %130 = vmatprep.mubr.f32.mxu0 0.0
    %131 = vmatmul.mubr.f32.gmra.mxu0 %v53
    %v132 = vpop.f32.mrf.mxu0
    %v133 = vadd.f32 %v47, %v132
    %v134 = vpop.f32.mrf.mxu0
    %135 = vmatprep.mubr.f32.mxu0 0.0
    %136 = vmatmul.mubr.f32.gmra.mxu0 %v56
    %v137 = vpop.f32.mrf.mxu0
    %v138 = vadd.f32 %v46, %v137
    %v139 = vpop.f32.mrf.mxu0
    %140 = vmatprep.mubr.f32.mxu0 0.0
    %141 = vmatmul.mubr.f32.gmra.mxu0 %v59
    %v142 = vpop.f32.mrf.mxu0
    %v143 = vadd.f32 %v47, %v142
    %v144 = vpop.f32.mrf.mxu0
    %145 = vdwg.mxu0
    %v146 = vmax.f32 %v128, 0.0
    %v147 = vmax.f32 %v133, 0.0
    %v148 = vmax.f32 %v138, 0.0
    %v149 = vmax.f32 %v143, 0.0
    %v150 = vld [vmem:[%s2 + $0x1] sm:$0x1]
    %v151 = vld [vmem:[#allocation2 + $0x60] sm:$0xff]
    %v152 = vld [vmem:[#allocation2 + $0x68] sm:$0xff]
    %v153 = vld [vmem:[#allocation2 + $0x70] sm:$0xff]
    %v154 = vld [vmem:[#allocation2 + $0x78] sm:$0xff]
    %v155 = vld [vmem:[#allocation2 + $0x80] sm:$0xff]
    %v156 = vld [vmem:[#allocation2 + $0x88] sm:$0xff]
    %v157 = vld [vmem:[#allocation2 + $0x90] sm:$0xff]
    %v158 = vld [vmem:[#allocation2 + $0x98] sm:$0xff]
    %v159 = vld [vmem:[#allocation2 + $0xa0] sm:$0xff]
    %v160 = vld [vmem:[#allocation2 + $0xa8] sm:$0xff]
    %v161 = vld [vmem:[#allocation2 + $0xb0] sm:$0xff]
    %v162 = vld [vmem:[#allocation2 + $0xb8] sm:$0xff]
    %v163 = vld [vmem:[#allocation2 + $0xc0] sm:$0xff]
    %v164 = vld [vmem:[#allocation2 + $0xc8] sm:$0xff]
    %v165 = vld [vmem:[#allocation2 + $0xd0] sm:$0xff]
    %v166 = vld [vmem:[#allocation2 + $0xd8] sm:$0xff]
    %v167 = vld [vmem:[#allocation2 + $0xe0] sm:$0xff]
    %v168 = vld [vmem:[#allocation2 + $0xe8] sm:$0xff]
    %v169 = vld [vmem:[#allocation2 + $0xf0] sm:$0xff]
    %v170 = vld [vmem:[#allocation2 + $0xf8] sm:$0xff]
    %v171 = vld [vmem:[#allocation2 + $0x100] sm:$0xff]
    %v172 = vld [vmem:[#allocation2 + $0x108] sm:$0xff]
    %v173 = vld [vmem:[#allocation2 + $0x110] sm:$0xff]
    %v174 = vld [vmem:[#allocation2 + $0x118] sm:$0xff]
    %v175 = vld [vmem:[#allocation2 + $0x120] sm:$0xff]
    %v176 = vld [vmem:[#allocation2 + $0x128] sm:$0xff]
    %v177 = vld [vmem:[#allocation2 + $0x130] sm:$0xff]
    %v178 = vld [vmem:[#allocation2 + $0x138] sm:$0xff]
    %v179 = vld [vmem:[#allocation2 + $0x140] sm:$0xff]
    %v180 = vld [vmem:[#allocation2 + $0x148] sm:$0xff]
    %v181 = vld [vmem:[#allocation2 + $0x150] sm:$0xff]
    %v182 = vld [vmem:[#allocation2 + $0x158] sm:$0xff]
    %v183 = vld [vmem:[#allocation2 + $0x160] sm:$0xff]
    %v184 = vld [vmem:[#allocation2 + $0x168] sm:$0xff]
    %v185 = vld [vmem:[#allocation2 + $0x170] sm:$0xff]
    %v186 = vld [vmem:[#allocation2 + $0x178] sm:$0xff]
    %v187 = vld [vmem:[#allocation2 + $0x180] sm:$0xff]
    %v188 = vld [vmem:[#allocation2 + $0x188] sm:$0xff]
    %v189 = vld [vmem:[#allocation2 + $0x190] sm:$0xff]
    %v190 = vld [vmem:[#allocation2 + $0x198] sm:$0xff]
    %v191 = vld [vmem:[#allocation2 + $0x1a0] sm:$0xff]
    %v192 = vld [vmem:[#allocation2 + $0x1a8] sm:$0xff]
    %v193 = vld [vmem:[#allocation2 + $0x1b0] sm:$0xff]
    %v194 = vld [vmem:[#allocation2 + $0x1b8] sm:$0xff]
    %v195 = vld [vmem:[#allocation2 + $0x1c0] sm:$0xff]
    %v196 = vld [vmem:[#allocation2 + $0x1c8] sm:$0xff]
    %v197 = vld [vmem:[#allocation2 + $0x1d0] sm:$0xff]
    %v198 = vld [vmem:[#allocation2 + $0x1d8] sm:$0xff]
    %199 = vmatprep.subr.mxu0 %v197
    %200 = vmatpush1.msra.mxu0 %v196
    %201 = vmatprep.subr.mxu0 %v194
    %202 = vmatpush1.msra.mxu0 %v193
    %203 = vmatprep.subr.mxu0 %v191
    %204 = vmatpush1.msra.mxu0 %v190
    %205 = vmatprep.subr.mxu0 %v188
    %206 = vmatpush1.msra.mxu0 %v187
    %207 = vmatprep.subr.mxu0 %v185
    %208 = vmatpush1.msra.mxu0 %v184
    %209 = vmatprep.subr.mxu0 %v182
    %210 = vmatpush1.msra.mxu0 %v181
    %211 = vmatprep.subr.mxu0 %v179
    %212 = vmatpush1.msra.mxu0 %v178
    %213 = vmatprep.subr.mxu0 %v176
    %214 = vmatpush1.msra.mxu0 %v175
    %215 = vmatprep.subr.mxu0 %v173
    %216 = vmatpush1.msra.mxu0 %v172
    %217 = vmatprep.subr.mxu0 %v170
    %218 = vmatpush1.msra.mxu0 %v169
    %219 = vmatprep.subr.mxu0 %v167
    %220 = vmatpush1.msra.mxu0 %v166
    %221 = vmatprep.subr.mxu0 %v164
    %222 = vmatpush1.msra.mxu0 %v163
    %223 = vmatprep.subr.mxu0 %v161
    %224 = vmatpush1.msra.mxu0 %v160
    %225 = vmatprep.subr.mxu0 %v158
    %226 = vmatpush1.msra.mxu0 %v157
    %227 = vmatprep.subr.mxu0 %v155
    %228 = vmatpush1.msra.mxu0 %v154
    %229 = vmatprep.subr.mxu0 %v152
    %230 = vmatpush1.msra.mxu0 %v151
    %231 = vmatprep.subr.mxu0 0.0
    %232 = vmatpush2.msra.mxu0 0.0
    %233 = vmatprep.subr.mxu0 0.0
    %234 = vmatpush2.msra.mxu0 0.0
    %235 = vmatprep.subr.mxu0 0.0
    %236 = vmatpush2.msra.mxu0 0.0
    %237 = vmatprep.subr.mxu0 0.0
    %238 = vmatpush2.msra.mxu0 0.0
    %239 = vmatprep.subr.mxu0 0.0
    %240 = vmatpush2.msra.mxu0 0.0
    %241 = vmatprep.subr.mxu0 0.0
    %242 = vmatpush2.msra.mxu0 0.0
    %243 = vmatprep.subr.mxu0 0.0
    %244 = vmatpush2.msra.mxu0 0.0
    %245 = vmatprep.subr.mxu0 0.0
    %246 = vmatpush2.msra.mxu0 0.0
    %247 = vmatprep.subr.mxu0 0.0
    %248 = vmatpush2.msra.mxu0 0.0
    %249 = vmatprep.subr.mxu0 0.0
    %250 = vmatpush2.msra.mxu0 0.0
    %251 = vmatprep.subr.mxu0 0.0
    %252 = vmatpush2.msra.mxu0 0.0
    %253 = vmatprep.subr.mxu0 0.0
    %254 = vmatpush2.msra.mxu0 0.0
    %255 = vmatprep.subr.mxu0 0.0
    %256 = vmatpush2.msra.mxu0 0.0
    %257 = vmatprep.subr.mxu0 0.0
    %258 = vmatpush2.msra.mxu0 0.0
    %259 = vmatprep.subr.mxu0 0.0
    %260 = vmatpush2.msra.mxu0 0.0
    %261 = vmatprep.subr.mxu0 0.0
    %262 = vmatpush2.msra.mxu0 0.0
    %263 = vmatprep.mubr.f32.mxu0 0.0
    %264 = vmatmul.mubr.f32.gmra.mxu0 0.0
    %v265 = vpop.f32.mrf.mxu0
    %v266 = vpop.f32.mrf.mxu0
    %v267 = vadd.f32 0.0, %v266
    %268 = vmatprep.mubr.f32.mxu0 0.0
    %269 = vmatmul.mubr.f32.gmra.mxu0 %v146
    %v270 = vpop.f32.mrf.mxu0
    %v271 = vadd.f32 0.0, %v270
    %v272 = vpop.f32.mrf.mxu0
    %v273 = vadd.f32 0.0, %v272
    %274 = vmatprep.mubr.f32.mxu0 0.0
    %275 = vmatmul.mubr.f32.gmra.mxu0 %v147
    %v276 = vpop.f32.mrf.mxu0
    %v277 = vadd.f32 0.0, %v276
    %v278 = vpop.f32.mrf.mxu0
    %v279 = vadd.f32 0.0, %v278
    %280 = vmatprep.mubr.f32.mxu0 0.0
    %281 = vmatmul.mubr.f32.gmra.mxu0 %v148
    %v282 = vpop.f32.mrf.mxu0
    %v283 = vadd.f32 0.0, %v282
    %v284 = vpop.f32.mrf.mxu0
    %v285 = vadd.f32 0.0, %v284
    %286 = vmatprep.mubr.f32.mxu0 0.0
    %287 = vmatmul.mubr.f32.gmra.mxu0 %v149
    %v288 = vpop.f32.mrf.mxu0
    %v289 = vadd.f32 0.0, %v288
    %v290 = vpop.f32.mrf.mxu0
    %v291 = vadd.f32 0.0, %v290
    %292 = vdwg.mxu0
    %293 = vmatprep.subr.mxu0 0.0
    %294 = vmatpush1.msra.mxu0 %v198
    %295 = vmatprep.subr.mxu0 0.0
    %296 = vmatpush1.msra.mxu0 %v195
    %297 = vmatprep.subr.mxu0 0.0
    %298 = vmatpush1.msra.mxu0 %v192
    %299 = vmatprep.subr.mxu0 0.0
    %300 = vmatpush1.msra.mxu0 %v189
    %301 = vmatprep.subr.mxu0 0.0
    %302 = vmatpush1.msra.mxu0 %v186
    %303 = vmatprep.subr.mxu0 0.0
    %304 = vmatpush1.msra.mxu0 %v183
    %305 = vmatprep.subr.mxu0 0.0
    %306 = vmatpush1.msra.mxu0 %v180
    %307 = vmatprep.subr.mxu0 0.0
    %308 = vmatpush1.msra.mxu0 %v177
    %309 = vmatprep.subr.mxu0 0.0
    %310 = vmatpush1.msra.mxu0 %v174
    %311 = vmatprep.subr.mxu0 0.0
    %312 = vmatpush1.msra.mxu0 %v171
    %313 = vmatprep.subr.mxu0 0.0
    %314 = vmatpush1.msra.mxu0 %v168
    %315 = vmatprep.subr.mxu0 0.0
    %316 = vmatpush1.msra.mxu0 %v165
    %317 = vmatprep.subr.mxu0 0.0
    %318 = vmatpush1.msra.mxu0 %v162
    %319 = vmatprep.subr.mxu0 0.0
    %320 = vmatpush1.msra.mxu0 %v159
    %321 = vmatprep.subr.mxu0 0.0
    %322 = vmatpush1.msra.mxu0 %v156
    %323 = vmatprep.subr.mxu0 0.0
    %324 = vmatpush1.msra.mxu0 %v153
    %325 = vmatprep.subr.mxu0 0.0
    %326 = vmatpush2.msra.mxu0 0.0
    %327 = vmatprep.subr.mxu0 0.0
    %328 = vmatpush2.msra.mxu0 0.0
    %329 = vmatprep.subr.mxu0 0.0
    %330 = vmatpush2.msra.mxu0 0.0
    %331 = vmatprep.subr.mxu0 0.0
    %332 = vmatpush2.msra.mxu0 0.0
    %333 = vmatprep.subr.mxu0 0.0
    %334 = vmatpush2.msra.mxu0 0.0
    %335 = vmatprep.subr.mxu0 0.0
    %336 = vmatpush2.msra.mxu0 0.0
    %337 = vmatprep.subr.mxu0 0.0
    %338 = vmatpush2.msra.mxu0 0.0
    %339 = vmatprep.subr.mxu0 0.0
    %340 = vmatpush2.msra.mxu0 0.0
    %341 = vmatprep.subr.mxu0 0.0
    %342 = vmatpush2.msra.mxu0 0.0
    %343 = vmatprep.subr.mxu0 0.0
    %344 = vmatpush2.msra.mxu0 0.0
    %345 = vmatprep.subr.mxu0 0.0
    %346 = vmatpush2.msra.mxu0 0.0
    %347 = vmatprep.subr.mxu0 0.0
    %348 = vmatpush2.msra.mxu0 0.0
    %349 = vmatprep.subr.mxu0 0.0
    %350 = vmatpush2.msra.mxu0 0.0
    %351 = vmatprep.subr.mxu0 0.0
    %352 = vmatpush2.msra.mxu0 0.0
    %353 = vmatprep.subr.mxu0 0.0
    %354 = vmatpush2.msra.mxu0 0.0
    %355 = vmatprep.subr.mxu0 0.0
    %356 = vmatpush2.msra.mxu0 0.0
    %357 = vmatprep.mubr.f32.mxu0 0.0
    %358 = vmatmul.mubr.f32.gmra.mxu0 0.0
    %v359 = vpop.f32.mrf.mxu0
    %v360 = vadd.f32 0.0, %v359
    %v361 = vpop.f32.mrf.mxu0
    %362 = vmatprep.mubr.f32.mxu0 0.0
    %363 = vmatmul.mubr.f32.gmra.mxu0 %v146
    %v364 = vpop.f32.mrf.mxu0
    %v365 = vadd.f32 0.0, %v364
    %v366 = vpop.f32.mrf.mxu0
    %367 = vmatprep.mubr.f32.mxu0 0.0
    %368 = vmatmul.mubr.f32.gmra.mxu0 %v147
    %v369 = vpop.f32.mrf.mxu0
    %v370 = vadd.f32 0.0, %v369
    %v371 = vpop.f32.mrf.mxu0
    %372 = vmatprep.mubr.f32.mxu0 0.0
    %373 = vmatmul.mubr.f32.gmra.mxu0 %v148
    %v374 = vpop.f32.mrf.mxu0
    %v375 = vadd.f32 0.0, %v374
    %v376 = vpop.f32.mrf.mxu0
    %377 = vmatprep.mubr.f32.mxu0 0.0
    %378 = vmatmul.mubr.f32.gmra.mxu0 %v149
    %v379 = vpop.f32.mrf.mxu0
    %v380 = vadd.f32 0.0, %v379
    %v381 = vpop.f32.mrf.mxu0
    %382 = vdwg.mxu0
    %vm383 = vcmp.lt.s32.totalorder %v29, 10
    %vm384 = vcmp.lt.s32.totalorder %v30, 10
    %v385 = vlaneseq
    %v386 = vshrl.u32 %v385, 7
    %v387 = vsub.s32 0, %v386
    %v388 = vrot.slane %v150, %v387
    %v389 = vsel %vm383, %v388, 0.0
    %v390 = vsel %vm384, %v388, 0.0
    %v391 = vadd.f32 %v389, %v271
    %v392 = vadd.f32 %v390, %v277
    %v393 = vadd.f32 %v389, %v283
    %v394 = vadd.f32 %v390, %v289
    %vm400 = vcmask 1040384
    %v401 = vrot.slane %v267, 7
    %v402 = vrot.slane %v273, 7
    %v403 = vsel %vm400, %v401, %v402
    %v404 = vrot.slane %v279, 7
    %v405 = vsel %vm400, %v402, %v404
    %v406 = vrot.slane %v285, 7
    %v407 = vsel %vm400, %v404, %v406
    %v408 = vrot.slane %v291, 7
    %v409 = vsel %vm400, %v406, %v408
    %v414 = vadd.f32 %v391, %v403
    %v415 = vadd.f32 %v392, %v405
    %v416 = vadd.f32 %v393, %v407
    %v417 = vadd.f32 %v394, %v409
    %vm423 = vcmask 1041408
    %v424 = vrot.slane %v360, 6
    %v425 = vrot.slane %v365, 6
    %v426 = vsel %vm423, %v424, %v425
    %v427 = vrot.slane %v370, 6
    %v428 = vsel %vm423, %v425, %v427
    %v429 = vrot.slane %v375, 6
    %v430 = vsel %vm423, %v427, %v429
    %v431 = vrot.slane %v380, 6
    %v432 = vsel %vm423, %v429, %v431
    %v437 = vadd.f32 %v414, %v426
    %v438 = vadd.f32 %v415, %v428
    %v439 = vadd.f32 %v416, %v430
    %v440 = vadd.f32 %v417, %v432
    %v441 = vmax.f32 %v437, 0.0
    %v442 = vmax.f32 %v438, 0.0
    %v443 = vmax.f32 %v439, 0.0
    %v444 = vmax.f32 %v440, 0.0
    %v445 = vld [vmem:[%s2 + $0x2] sm:$0x1]
    %v446 = vld [vmem:[#allocation2 + $0x1e0] sm:$0xff]
    %v447 = vld [vmem:[#allocation2 + $0x1e8] sm:$0xff]
    %v448 = vld [vmem:[#allocation2 + $0x1f0] sm:$0xff]
    %v449 = vld [vmem:[#allocation2 + $0x1f8] sm:$0xff]
    %v450 = vld [vmem:[#allocation2 + $0x200] sm:$0xff]
    %v451 = vld [vmem:[#allocation2 + $0x208] sm:$0xff]
    %v452 = vld [vmem:[#allocation2 + $0x210] sm:$0xff]
    %v453 = vld [vmem:[#allocation2 + $0x218] sm:$0xff]
    %v454 = vld [vmem:[#allocation2 + $0x220] sm:$0xff]
    %v455 = vld [vmem:[#allocation2 + $0x228] sm:$0xff]
    %v456 = vld [vmem:[#allocation2 + $0x230] sm:$0xff]
    %v457 = vld [vmem:[#allocation2 + $0x238] sm:$0xff]
    %v458 = vld [vmem:[#allocation2 + $0x240] sm:$0xff]
    %v459 = vld [vmem:[#allocation2 + $0x248] sm:$0xff]
    %v460 = vld [vmem:[#allocation2 + $0x250] sm:$0xff]
    %v461 = vld [vmem:[#allocation2 + $0x258] sm:$0xff]
    %v462 = vld [vmem:[#allocation2 + $0x260] sm:$0xff]
    %v463 = vld [vmem:[#allocation2 + $0x268] sm:$0xff]
    %v464 = vld [vmem:[#allocation2 + $0x270] sm:$0xff]
    %v465 = vld [vmem:[#allocation2 + $0x278] sm:$0xff]
    %v466 = vld [vmem:[#allocation2 + $0x280] sm:$0xff]
    %v467 = vld [vmem:[#allocation2 + $0x288] sm:$0xff]
    %v468 = vld [vmem:[#allocation2 + $0x290] sm:$0xff]
    %v469 = vld [vmem:[#allocation2 + $0x298] sm:$0xff]
    %v470 = vld [vmem:[#allocation2 + $0x2a0] sm:$0xff]
    %v471 = vld [vmem:[#allocation2 + $0x2a8] sm:$0xff]
    %v472 = vld [vmem:[#allocation2 + $0x2b0] sm:$0xff]
    %v473 = vld [vmem:[#allocation2 + $0x2b8] sm:$0xff]
    %v474 = vld [vmem:[#allocation2 + $0x2c0] sm:$0xff]
    %v475 = vld [vmem:[#allocation2 + $0x2c8] sm:$0xff]
    %v476 = vld [vmem:[#allocation2 + $0x2d0] sm:$0xff]
    %v477 = vld [vmem:[#allocation2 + $0x2d8] sm:$0xff]
    %v478 = vld [vmem:[#allocation2 + $0x2e0] sm:$0xff]
    %v479 = vld [vmem:[#allocation2 + $0x2e8] sm:$0xff]
    %v480 = vld [vmem:[#allocation2 + $0x2f0] sm:$0xff]
    %v481 = vld [vmem:[#allocation2 + $0x2f8] sm:$0xff]
    %v482 = vld [vmem:[#allocation2 + $0x300] sm:$0xff]
    %v483 = vld [vmem:[#allocation2 + $0x308] sm:$0xff]
    %v484 = vld [vmem:[#allocation2 + $0x310] sm:$0xff]
    %v485 = vld [vmem:[#allocation2 + $0x318] sm:$0xff]
    %v486 = vld [vmem:[#allocation2 + $0x320] sm:$0xff]
    %v487 = vld [vmem:[#allocation2 + $0x328] sm:$0xff]
    %v488 = vld [vmem:[#allocation2 + $0x330] sm:$0xff]
    %v489 = vld [vmem:[#allocation2 + $0x338] sm:$0xff]
    %v490 = vld [vmem:[#allocation2 + $0x340] sm:$0xff]
    %v491 = vld [vmem:[#allocation2 + $0x348] sm:$0xff]
    %v492 = vld [vmem:[#allocation2 + $0x350] sm:$0xff]
    %v493 = vld [vmem:[#allocation2 + $0x358] sm:$0xff]
    %494 = vmatprep.subr.mxu0 %v492
    %495 = vmatpush1.msra.mxu0 %v491
    %496 = vmatprep.subr.mxu0 %v489
    %497 = vmatpush1.msra.mxu0 %v488
    %498 = vmatprep.subr.mxu0 %v486
    %499 = vmatpush1.msra.mxu0 %v485
    %500 = vmatprep.subr.mxu0 %v483
    %501 = vmatpush1.msra.mxu0 %v482
    %502 = vmatprep.subr.mxu0 %v480
    %503 = vmatpush1.msra.mxu0 %v479
    %504 = vmatprep.subr.mxu0 %v477
    %505 = vmatpush1.msra.mxu0 %v476
    %506 = vmatprep.subr.mxu0 %v474
    %507 = vmatpush1.msra.mxu0 %v473
    %508 = vmatprep.subr.mxu0 %v471
    %509 = vmatpush1.msra.mxu0 %v470
    %510 = vmatprep.subr.mxu0 %v468
    %511 = vmatpush1.msra.mxu0 %v467
    %512 = vmatprep.subr.mxu0 %v465
    %513 = vmatpush1.msra.mxu0 %v464
    %514 = vmatprep.subr.mxu0 %v462
    %515 = vmatpush1.msra.mxu0 %v461
    %516 = vmatprep.subr.mxu0 %v459
    %517 = vmatpush1.msra.mxu0 %v458
    %518 = vmatprep.subr.mxu0 %v456
    %519 = vmatpush1.msra.mxu0 %v455
    %520 = vmatprep.subr.mxu0 %v453
    %521 = vmatpush1.msra.mxu0 %v452
    %522 = vmatprep.subr.mxu0 %v450
    %523 = vmatpush1.msra.mxu0 %v449
    %524 = vmatprep.subr.mxu0 %v447
    %525 = vmatpush1.msra.mxu0 %v446
    %526 = vmatprep.subr.mxu0 0.0
    %527 = vmatpush2.msra.mxu0 0.0
    %528 = vmatprep.subr.mxu0 0.0
    %529 = vmatpush2.msra.mxu0 0.0
    %530 = vmatprep.subr.mxu0 0.0
    %531 = vmatpush2.msra.mxu0 0.0
    %532 = vmatprep.subr.mxu0 0.0
    %533 = vmatpush2.msra.mxu0 0.0
    %534 = vmatprep.subr.mxu0 0.0
    %535 = vmatpush2.msra.mxu0 0.0
    %536 = vmatprep.subr.mxu0 0.0
    %537 = vmatpush2.msra.mxu0 0.0
    %538 = vmatprep.subr.mxu0 0.0
    %539 = vmatpush2.msra.mxu0 0.0
    %540 = vmatprep.subr.mxu0 0.0
    %541 = vmatpush2.msra.mxu0 0.0
    %542 = vmatprep.subr.mxu0 0.0
    %543 = vmatpush2.msra.mxu0 0.0
    %544 = vmatprep.subr.mxu0 0.0
    %545 = vmatpush2.msra.mxu0 0.0
    %546 = vmatprep.subr.mxu0 0.0
    %547 = vmatpush2.msra.mxu0 0.0
    %548 = vmatprep.subr.mxu0 0.0
    %549 = vmatpush2.msra.mxu0 0.0
    %550 = vmatprep.subr.mxu0 0.0
    %551 = vmatpush2.msra.mxu0 0.0
    %552 = vmatprep.subr.mxu0 0.0
    %553 = vmatpush2.msra.mxu0 0.0
    %554 = vmatprep.subr.mxu0 0.0
    %555 = vmatpush2.msra.mxu0 0.0
    %556 = vmatprep.subr.mxu0 0.0
    %557 = vmatpush2.msra.mxu0 0.0
    %558 = vmatprep.mubr.f32.mxu0 0.0
    %559 = vmatmul.mubr.f32.gmra.mxu0 0.0
    %v560 = vpop.f32.mrf.mxu0
    %v561 = vpop.f32.mrf.mxu0
    %v562 = vadd.f32 0.0, %v561
    %563 = vmatprep.mubr.f32.mxu0 0.0
    %564 = vmatmul.mubr.f32.gmra.mxu0 %v441
    %v565 = vpop.f32.mrf.mxu0
    %v566 = vadd.f32 0.0, %v565
    %v567 = vpop.f32.mrf.mxu0
    %v568 = vadd.f32 0.0, %v567
    %569 = vmatprep.mubr.f32.mxu0 0.0
    %570 = vmatmul.mubr.f32.gmra.mxu0 %v442
    %v571 = vpop.f32.mrf.mxu0
    %v572 = vadd.f32 0.0, %v571
    %v573 = vpop.f32.mrf.mxu0
    %v574 = vadd.f32 0.0, %v573
    %575 = vmatprep.mubr.f32.mxu0 0.0
    %576 = vmatmul.mubr.f32.gmra.mxu0 %v443
    %v577 = vpop.f32.mrf.mxu0
    %v578 = vadd.f32 0.0, %v577
    %v579 = vpop.f32.mrf.mxu0
    %v580 = vadd.f32 0.0, %v579
    %581 = vmatprep.mubr.f32.mxu0 0.0
    %582 = vmatmul.mubr.f32.gmra.mxu0 %v444
    %v583 = vpop.f32.mrf.mxu0
    %v584 = vadd.f32 0.0, %v583
    %v585 = vpop.f32.mrf.mxu0
    %v586 = vadd.f32 0.0, %v585
    %587 = vdwg.mxu0
    %588 = vmatprep.subr.mxu0 0.0
    %589 = vmatpush1.msra.mxu0 %v493
    %590 = vmatprep.subr.mxu0 0.0
    %591 = vmatpush1.msra.mxu0 %v490
    %592 = vmatprep.subr.mxu0 0.0
    %593 = vmatpush1.msra.mxu0 %v487
    %594 = vmatprep.subr.mxu0 0.0
    %595 = vmatpush1.msra.mxu0 %v484
    %596 = vmatprep.subr.mxu0 0.0
    %597 = vmatpush1.msra.mxu0 %v481
    %598 = vmatprep.subr.mxu0 0.0
    %599 = vmatpush1.msra.mxu0 %v478
    %600 = vmatprep.subr.mxu0 0.0
    %601 = vmatpush1.msra.mxu0 %v475
    %602 = vmatprep.subr.mxu0 0.0
    %603 = vmatpush1.msra.mxu0 %v472
    %604 = vmatprep.subr.mxu0 0.0
    %605 = vmatpush1.msra.mxu0 %v469
    %606 = vmatprep.subr.mxu0 0.0
    %607 = vmatpush1.msra.mxu0 %v466
    %608 = vmatprep.subr.mxu0 0.0
    %609 = vmatpush1.msra.mxu0 %v463
    %610 = vmatprep.subr.mxu0 0.0
    %611 = vmatpush1.msra.mxu0 %v460
    %612 = vmatprep.subr.mxu0 0.0
    %613 = vmatpush1.msra.mxu0 %v457
    %614 = vmatprep.subr.mxu0 0.0
    %615 = vmatpush1.msra.mxu0 %v454
    %616 = vmatprep.subr.mxu0 0.0
    %617 = vmatpush1.msra.mxu0 %v451
    %618 = vmatprep.subr.mxu0 0.0
    %619 = vmatpush1.msra.mxu0 %v448
    %620 = vmatprep.subr.mxu0 0.0
    %621 = vmatpush2.msra.mxu0 0.0
    %622 = vmatprep.subr.mxu0 0.0
    %623 = vmatpush2.msra.mxu0 0.0
    %624 = vmatprep.subr.mxu0 0.0
    %625 = vmatpush2.msra.mxu0 0.0
    %626 = vmatprep.subr.mxu0 0.0
    %627 = vmatpush2.msra.mxu0 0.0
    %628 = vmatprep.subr.mxu0 0.0
    %629 = vmatpush2.msra.mxu0 0.0
    %630 = vmatprep.subr.mxu0 0.0
    %631 = vmatpush2.msra.mxu0 0.0
    %632 = vmatprep.subr.mxu0 0.0
    %633 = vmatpush2.msra.mxu0 0.0
    %634 = vmatprep.subr.mxu0 0.0
    %635 = vmatpush2.msra.mxu0 0.0
    %636 = vmatprep.subr.mxu0 0.0
    %637 = vmatpush2.msra.mxu0 0.0
    %638 = vmatprep.subr.mxu0 0.0
    %639 = vmatpush2.msra.mxu0 0.0
    %640 = vmatprep.subr.mxu0 0.0
    %641 = vmatpush2.msra.mxu0 0.0
    %642 = vmatprep.subr.mxu0 0.0
    %643 = vmatpush2.msra.mxu0 0.0
    %644 = vmatprep.subr.mxu0 0.0
    %645 = vmatpush2.msra.mxu0 0.0
    %646 = vmatprep.subr.mxu0 0.0
    %647 = vmatpush2.msra.mxu0 0.0
    %648 = vmatprep.subr.mxu0 0.0
    %649 = vmatpush2.msra.mxu0 0.0
    %650 = vmatprep.subr.mxu0 0.0
    %651 = vmatpush2.msra.mxu0 0.0
    %652 = vmatprep.mubr.f32.mxu0 0.0
    %653 = vmatmul.mubr.f32.gmra.mxu0 0.0
    %v654 = vpop.f32.mrf.mxu0
    %v655 = vadd.f32 0.0, %v654
    %v656 = vpop.f32.mrf.mxu0
    %657 = vmatprep.mubr.f32.mxu0 0.0
    %658 = vmatmul.mubr.f32.gmra.mxu0 %v441
    %v659 = vpop.f32.mrf.mxu0
    %v660 = vadd.f32 0.0, %v659
    %v661 = vpop.f32.mrf.mxu0
    %662 = vmatprep.mubr.f32.mxu0 0.0
    %663 = vmatmul.mubr.f32.gmra.mxu0 %v442
    %v664 = vpop.f32.mrf.mxu0
    %v665 = vadd.f32 0.0, %v664
    %v666 = vpop.f32.mrf.mxu0
    %667 = vmatprep.mubr.f32.mxu0 0.0
    %668 = vmatmul.mubr.f32.gmra.mxu0 %v443
    %v669 = vpop.f32.mrf.mxu0
    %v670 = vadd.f32 0.0, %v669
    %v671 = vpop.f32.mrf.mxu0
    %672 = vmatprep.mubr.f32.mxu0 0.0
    %673 = vmatmul.mubr.f32.gmra.mxu0 %v444
    %v674 = vpop.f32.mrf.mxu0
    %v675 = vadd.f32 0.0, %v674
    %v676 = vpop.f32.mrf.mxu0
    %677 = vdwg.mxu0
    %vm678 = vcmp.lt.s32.totalorder %v29, 12
    %vm679 = vcmp.lt.s32.totalorder %v30, 12
    %v680 = vlaneseq
    %v681 = vshrl.u32 %v680, 7
    %v682 = vsub.s32 0, %v681
    %v683 = vrot.slane %v445, %v682
    %v684 = vsel %vm678, %v683, 0.0
    %v685 = vsel %vm679, %v683, 0.0
    %v686 = vadd.f32 %v684, %v566
    %v687 = vadd.f32 %v685, %v572
    %v688 = vadd.f32 %v684, %v578
    %v689 = vadd.f32 %v685, %v584
    %v695 = vrot.slane %v562, 7
    %v696 = vrot.slane %v568, 7
    %v697 = vsel %vm400, %v695, %v696
    %v698 = vrot.slane %v574, 7
    %v699 = vsel %vm400, %v696, %v698
    %v700 = vrot.slane %v580, 7
    %v701 = vsel %vm400, %v698, %v700
    %v702 = vrot.slane %v586, 7
    %v703 = vsel %vm400, %v700, %v702
    %v708 = vadd.f32 %v686, %v697
    %v709 = vadd.f32 %v687, %v699
    %v710 = vadd.f32 %v688, %v701
    %v711 = vadd.f32 %v689, %v703
    %v717 = vrot.slane %v655, 6
    %v718 = vrot.slane %v660, 6
    %v719 = vsel %vm423, %v717, %v718
    %v720 = vrot.slane %v665, 6
    %v721 = vsel %vm423, %v718, %v720
    %v722 = vrot.slane %v670, 6
    %v723 = vsel %vm423, %v720, %v722
    %v724 = vrot.slane %v675, 6
    %v725 = vsel %vm423, %v722, %v724
    %v730 = vadd.f32 %v708, %v719
    %v731 = vadd.f32 %v709, %v721
    %v732 = vadd.f32 %v710, %v723
    %v733 = vadd.f32 %v711, %v725
    %v734 = vmax.f32 %v730, 0.0
    %v735 = vmax.f32 %v731, 0.0
    %v736 = vmax.f32 %v732, 0.0
    %v737 = vmax.f32 %v733, 0.0
    %v738 = vld [vmem:[%s2 + $0x3] sm:$0x1]
    %v739 = vld [vmem:[#allocation2 + $0x360] sm:$0xff]
    %v740 = vld [vmem:[#allocation2 + $0x368] sm:$0xff]
    %v741 = vld [vmem:[#allocation2 + $0x370] sm:$0xff]
    %v742 = vld [vmem:[#allocation2 + $0x378] sm:$0xff]
    %v743 = vld [vmem:[#allocation2 + $0x380] sm:$0xff]
    %v744 = vld [vmem:[#allocation2 + $0x388] sm:$0xff]
    %v745 = vld [vmem:[#allocation2 + $0x390] sm:$0xff]
    %v746 = vld [vmem:[#allocation2 + $0x398] sm:$0xff]
    %v747 = vld [vmem:[#allocation2 + $0x3a0] sm:$0xff]
    %v748 = vld [vmem:[#allocation2 + $0x3a8] sm:$0xff]
    %v749 = vld [vmem:[#allocation2 + $0x3b0] sm:$0xff]
    %v750 = vld [vmem:[#allocation2 + $0x3b8] sm:$0xff]
    %v751 = vld [vmem:[#allocation2 + $0x3c0] sm:$0xff]
    %v752 = vld [vmem:[#allocation2 + $0x3c8] sm:$0xff]
    %v753 = vld [vmem:[#allocation2 + $0x3d0] sm:$0xff]
    %v754 = vld [vmem:[#allocation2 + $0x3d8] sm:$0xff]
    %v755 = vld [vmem:[#allocation2 + $0x3e0] sm:$0xff]
    %v756 = vld [vmem:[#allocation2 + $0x3e8] sm:$0xff]
    %v757 = vld [vmem:[#allocation2 + $0x3f0] sm:$0xff]
    %v758 = vld [vmem:[#allocation2 + $0x3f8] sm:$0xff]
    %v759 = vld [vmem:[#allocation2 + $0x400] sm:$0xff]
    %v760 = vld [vmem:[#allocation2 + $0x408] sm:$0xff]
    %v761 = vld [vmem:[#allocation2 + $0x410] sm:$0xff]
    %v762 = vld [vmem:[#allocation2 + $0x418] sm:$0xff]
    %v763 = vld [vmem:[#allocation2 + $0x420] sm:$0xff]
    %v764 = vld [vmem:[#allocation2 + $0x428] sm:$0xff]
    %v765 = vld [vmem:[#allocation2 + $0x430] sm:$0xff]
    %v766 = vld [vmem:[#allocation2 + $0x438] sm:$0xff]
    %v767 = vld [vmem:[#allocation2 + $0x440] sm:$0xff]
    %v768 = vld [vmem:[#allocation2 + $0x448] sm:$0xff]
    %v769 = vld [vmem:[#allocation2 + $0x450] sm:$0xff]
    %v770 = vld [vmem:[#allocation2 + $0x458] sm:$0xff]
    %v771 = vld [vmem:[#allocation2 + $0x460] sm:$0xff]
    %v772 = vld [vmem:[#allocation2 + $0x468] sm:$0xff]
    %v773 = vld [vmem:[#allocation2 + $0x470] sm:$0xff]
    %v774 = vld [vmem:[#allocation2 + $0x478] sm:$0xff]
    %v775 = vld [vmem:[#allocation2 + $0x480] sm:$0xff]
    %v776 = vld [vmem:[#allocation2 + $0x488] sm:$0xff]
    %v777 = vld [vmem:[#allocation2 + $0x490] sm:$0xff]
    %v778 = vld [vmem:[#allocation2 + $0x498] sm:$0xff]
    %v779 = vld [vmem:[#allocation2 + $0x4a0] sm:$0xff]
    %v780 = vld [vmem:[#allocation2 + $0x4a8] sm:$0xff]
    %v781 = vld [vmem:[#allocation2 + $0x4b0] sm:$0xff]
    %v782 = vld [vmem:[#allocation2 + $0x4b8] sm:$0xff]
    %v783 = vld [vmem:[#allocation2 + $0x4c0] sm:$0xff]
    %v784 = vld [vmem:[#allocation2 + $0x4c8] sm:$0xff]
    %v785 = vld [vmem:[#allocation2 + $0x4d0] sm:$0xff]
    %v786 = vld [vmem:[#allocation2 + $0x4d8] sm:$0xff]
    %787 = vmatprep.subr.mxu0 %v785
    %788 = vmatpush1.msra.mxu0 %v784
    %789 = vmatprep.subr.mxu0 %v782
    %790 = vmatpush1.msra.mxu0 %v781
    %791 = vmatprep.subr.mxu0 %v779
    %792 = vmatpush1.msra.mxu0 %v778
    %793 = vmatprep.subr.mxu0 %v776
    %794 = vmatpush1.msra.mxu0 %v775
    %795 = vmatprep.subr.mxu0 %v773
    %796 = vmatpush1.msra.mxu0 %v772
    %797 = vmatprep.subr.mxu0 %v770
    %798 = vmatpush1.msra.mxu0 %v769
    %799 = vmatprep.subr.mxu0 %v767
    %800 = vmatpush1.msra.mxu0 %v766
    %801 = vmatprep.subr.mxu0 %v764
    %802 = vmatpush1.msra.mxu0 %v763
    %803 = vmatprep.subr.mxu0 %v761
    %804 = vmatpush1.msra.mxu0 %v760
    %805 = vmatprep.subr.mxu0 %v758
    %806 = vmatpush1.msra.mxu0 %v757
    %807 = vmatprep.subr.mxu0 %v755
    %808 = vmatpush1.msra.mxu0 %v754
    %809 = vmatprep.subr.mxu0 %v752
    %810 = vmatpush1.msra.mxu0 %v751
    %811 = vmatprep.subr.mxu0 %v749
    %812 = vmatpush1.msra.mxu0 %v748
    %813 = vmatprep.subr.mxu0 %v746
    %814 = vmatpush1.msra.mxu0 %v745
    %815 = vmatprep.subr.mxu0 %v743
    %816 = vmatpush1.msra.mxu0 %v742
    %817 = vmatprep.subr.mxu0 %v740
    %818 = vmatpush1.msra.mxu0 %v739
    %819 = vmatprep.subr.mxu0 0.0
    %820 = vmatpush2.msra.mxu0 0.0
    %821 = vmatprep.subr.mxu0 0.0
    %822 = vmatpush2.msra.mxu0 0.0
    %823 = vmatprep.subr.mxu0 0.0
    %824 = vmatpush2.msra.mxu0 0.0
    %825 = vmatprep.subr.mxu0 0.0
    %826 = vmatpush2.msra.mxu0 0.0
    %827 = vmatprep.subr.mxu0 0.0
    %828 = vmatpush2.msra.mxu0 0.0
    %829 = vmatprep.subr.mxu0 0.0
    %830 = vmatpush2.msra.mxu0 0.0
    %831 = vmatprep.subr.mxu0 0.0
    %832 = vmatpush2.msra.mxu0 0.0
    %833 = vmatprep.subr.mxu0 0.0
    %834 = vmatpush2.msra.mxu0 0.0
    %835 = vmatprep.subr.mxu0 0.0
    %836 = vmatpush2.msra.mxu0 0.0
    %837 = vmatprep.subr.mxu0 0.0
    %838 = vmatpush2.msra.mxu0 0.0
    %839 = vmatprep.subr.mxu0 0.0
    %840 = vmatpush2.msra.mxu0 0.0
    %841 = vmatprep.subr.mxu0 0.0
    %842 = vmatpush2.msra.mxu0 0.0
    %843 = vmatprep.subr.mxu0 0.0
    %844 = vmatpush2.msra.mxu0 0.0
    %845 = vmatprep.subr.mxu0 0.0
    %846 = vmatpush2.msra.mxu0 0.0
    %847 = vmatprep.subr.mxu0 0.0
    %848 = vmatpush2.msra.mxu0 0.0
    %849 = vmatprep.subr.mxu0 0.0
    %850 = vmatpush2.msra.mxu0 0.0
    %851 = vmatprep.mubr.f32.mxu0 0.0
    %852 = vmatmul.mubr.f32.gmra.mxu0 0.0
    %v853 = vpop.f32.mrf.mxu0
    %v854 = vpop.f32.mrf.mxu0
    %v855 = vadd.f32 0.0, %v854
    %856 = vmatprep.mubr.f32.mxu0 0.0
    %857 = vmatmul.mubr.f32.gmra.mxu0 %v734
    %v858 = vpop.f32.mrf.mxu0
    %v859 = vadd.f32 0.0, %v858
    %v860 = vpop.f32.mrf.mxu0
    %v861 = vadd.f32 0.0, %v860
    %862 = vmatprep.mubr.f32.mxu0 0.0
    %863 = vmatmul.mubr.f32.gmra.mxu0 %v735
    %v864 = vpop.f32.mrf.mxu0
    %v865 = vadd.f32 0.0, %v864
    %v866 = vpop.f32.mrf.mxu0
    %v867 = vadd.f32 0.0, %v866
    %868 = vmatprep.mubr.f32.mxu0 0.0
    %869 = vmatmul.mubr.f32.gmra.mxu0 %v736
    %v870 = vpop.f32.mrf.mxu0
    %v871 = vadd.f32 0.0, %v870
    %v872 = vpop.f32.mrf.mxu0
    %v873 = vadd.f32 0.0, %v872
    %874 = vmatprep.mubr.f32.mxu0 0.0
    %875 = vmatmul.mubr.f32.gmra.mxu0 %v737
    %v876 = vpop.f32.mrf.mxu0
    %v877 = vadd.f32 0.0, %v876
    %v878 = vpop.f32.mrf.mxu0
    %v879 = vadd.f32 0.0, %v878
    %880 = vdwg.mxu0
    %881 = vmatprep.subr.mxu0 0.0
    %882 = vmatpush1.msra.mxu0 %v786
    %883 = vmatprep.subr.mxu0 0.0
    %884 = vmatpush1.msra.mxu0 %v783
    %885 = vmatprep.subr.mxu0 0.0
    %886 = vmatpush1.msra.mxu0 %v780
    %887 = vmatprep.subr.mxu0 0.0
    %888 = vmatpush1.msra.mxu0 %v777
    %889 = vmatprep.subr.mxu0 0.0
    %890 = vmatpush1.msra.mxu0 %v774
    %891 = vmatprep.subr.mxu0 0.0
    %892 = vmatpush1.msra.mxu0 %v771
    %893 = vmatprep.subr.mxu0 0.0
    %894 = vmatpush1.msra.mxu0 %v768
    %895 = vmatprep.subr.mxu0 0.0
    %896 = vmatpush1.msra.mxu0 %v765
    %897 = vmatprep.subr.mxu0 0.0
    %898 = vmatpush1.msra.mxu0 %v762
    %899 = vmatprep.subr.mxu0 0.0
    %900 = vmatpush1.msra.mxu0 %v759
    %901 = vmatprep.subr.mxu0 0.0
    %902 = vmatpush1.msra.mxu0 %v756
    %903 = vmatprep.subr.mxu0 0.0
    %904 = vmatpush1.msra.mxu0 %v753
    %905 = vmatprep.subr.mxu0 0.0
    %906 = vmatpush1.msra.mxu0 %v750
    %907 = vmatprep.subr.mxu0 0.0
    %908 = vmatpush1.msra.mxu0 %v747
    %909 = vmatprep.subr.mxu0 0.0
    %910 = vmatpush1.msra.mxu0 %v744
    %911 = vmatprep.subr.mxu0 0.0
    %912 = vmatpush1.msra.mxu0 %v741
    %913 = vmatprep.subr.mxu0 0.0
    %914 = vmatpush2.msra.mxu0 0.0
    %915 = vmatprep.subr.mxu0 0.0
    %916 = vmatpush2.msra.mxu0 0.0
    %917 = vmatprep.subr.mxu0 0.0
    %918 = vmatpush2.msra.mxu0 0.0
    %919 = vmatprep.subr.mxu0 0.0
    %920 = vmatpush2.msra.mxu0 0.0
    %921 = vmatprep.subr.mxu0 0.0
    %922 = vmatpush2.msra.mxu0 0.0
    %923 = vmatprep.subr.mxu0 0.0
    %924 = vmatpush2.msra.mxu0 0.0
    %925 = vmatprep.subr.mxu0 0.0
    %926 = vmatpush2.msra.mxu0 0.0
    %927 = vmatprep.subr.mxu0 0.0
    %928 = vmatpush2.msra.mxu0 0.0
    %929 = vmatprep.subr.mxu0 0.0
    %930 = vmatpush2.msra.mxu0 0.0
    %931 = vmatprep.subr.mxu0 0.0
    %932 = vmatpush2.msra.mxu0 0.0
    %933 = vmatprep.subr.mxu0 0.0
    %934 = vmatpush2.msra.mxu0 0.0
    %935 = vmatprep.subr.mxu0 0.0
    %936 = vmatpush2.msra.mxu0 0.0
    %937 = vmatprep.subr.mxu0 0.0
    %938 = vmatpush2.msra.mxu0 0.0
    %939 = vmatprep.subr.mxu0 0.0
    %940 = vmatpush2.msra.mxu0 0.0
    %941 = vmatprep.subr.mxu0 0.0
    %942 = vmatpush2.msra.mxu0 0.0
    %943 = vmatprep.subr.mxu0 0.0
    %944 = vmatpush2.msra.mxu0 0.0
    %945 = vmatprep.mubr.f32.mxu0 0.0
    %946 = vmatmul.mubr.f32.gmra.mxu0 0.0
    %v947 = vpop.f32.mrf.mxu0
    %v948 = vadd.f32 0.0, %v947
    %v949 = vpop.f32.mrf.mxu0
    %950 = vmatprep.mubr.f32.mxu0 0.0
    %951 = vmatmul.mubr.f32.gmra.mxu0 %v734
    %v952 = vpop.f32.mrf.mxu0
    %v953 = vadd.f32 0.0, %v952
    %v954 = vpop.f32.mrf.mxu0
    %955 = vmatprep.mubr.f32.mxu0 0.0
    %956 = vmatmul.mubr.f32.gmra.mxu0 %v735
    %v957 = vpop.f32.mrf.mxu0
    %v958 = vadd.f32 0.0, %v957
    %v959 = vpop.f32.mrf.mxu0
    %960 = vmatprep.mubr.f32.mxu0 0.0
    %961 = vmatmul.mubr.f32.gmra.mxu0 %v736
    %v962 = vpop.f32.mrf.mxu0
    %v963 = vadd.f32 0.0, %v962
    %v964 = vpop.f32.mrf.mxu0
    %965 = vmatprep.mubr.f32.mxu0 0.0
    %966 = vmatmul.mubr.f32.gmra.mxu0 %v737
    %v967 = vpop.f32.mrf.mxu0
    %v968 = vadd.f32 0.0, %v967
    %v969 = vpop.f32.mrf.mxu0
    %970 = vdwg.mxu0
    %vm971 = vcmp.lt.s32.totalorder %v29, 14
    %vm972 = vcmp.lt.s32.totalorder %v30, 14
    %v973 = vlaneseq
    %v974 = vshrl.u32 %v973, 7
    %v975 = vsub.s32 0, %v974
    %v976 = vrot.slane %v738, %v975
    %v977 = vsel %vm971, %v976, 0.0
    %v978 = vsel %vm972, %v976, 0.0
    %v979 = vadd.f32 %v977, %v859
    %v980 = vadd.f32 %v978, %v865
    %v981 = vadd.f32 %v977, %v871
    %v982 = vadd.f32 %v978, %v877
    %v988 = vrot.slane %v855, 7
    %v989 = vrot.slane %v861, 7
    %v990 = vsel %vm400, %v988, %v989
    %v991 = vrot.slane %v867, 7
    %v992 = vsel %vm400, %v989, %v991
    %v993 = vrot.slane %v873, 7
    %v994 = vsel %vm400, %v991, %v993
    %v995 = vrot.slane %v879, 7
    %v996 = vsel %vm400, %v993, %v995
    %v1001 = vadd.f32 %v979, %v990
    %v1002 = vadd.f32 %v980, %v992
    %v1003 = vadd.f32 %v981, %v994
    %v1004 = vadd.f32 %v982, %v996
    %v1010 = vrot.slane %v948, 6
    %v1011 = vrot.slane %v953, 6
    %v1012 = vsel %vm423, %v1010, %v1011
    %v1013 = vrot.slane %v958, 6
    %v1014 = vsel %vm423, %v1011, %v1013
    %v1015 = vrot.slane %v963, 6
    %v1016 = vsel %vm423, %v1013, %v1015
    %v1017 = vrot.slane %v968, 6
    %v1018 = vsel %vm423, %v1015, %v1017
    %v1023 = vadd.f32 %v1001, %v1012
    %v1024 = vadd.f32 %v1002, %v1014
    %v1025 = vadd.f32 %v1003, %v1016
    %v1026 = vadd.f32 %v1004, %v1018
    %v1027 = vmax.f32 %v1023, 0.0
    %v1028 = vmax.f32 %v1024, 0.0
    %v1029 = vmax.f32 %v1025, 0.0
    %v1030 = vmax.f32 %v1026, 0.0
    %v1031 = vld [vmem:[#allocation2 + $0x4e0] sm:$0xff]
    %v1032 = vld [vmem:[#allocation2 + $0x4f8] sm:$0xff]
    %v1033 = vld [vmem:[#allocation2 + $0x510] sm:$0xff]
    %v1034 = vld [vmem:[#allocation2 + $0x528] sm:$0xff]
    %v1035 = vld [vmem:[#allocation2 + $0x540] sm:$0xff]
    %v1036 = vld [vmem:[#allocation2 + $0x558] sm:$0xff]
    %v1037 = vld [vmem:[#allocation2 + $0x570] sm:$0xff]
    %v1038 = vld [vmem:[#allocation2 + $0x588] sm:$0xff]
    %v1039 = vld [vmem:[#allocation2 + $0x5a0] sm:$0xff]
    %v1040 = vld [vmem:[#allocation2 + $0x5b8] sm:$0xff]
    %v1041 = vld [vmem:[#allocation2 + $0x5d0] sm:$0xff]
    %v1042 = vld [vmem:[#allocation2 + $0x5e8] sm:$0xff]
    %v1043 = vld [vmem:[#allocation2 + $0x600] sm:$0xff]
    %v1044 = vld [vmem:[#allocation2 + $0x618] sm:$0xff]
    %v1045 = vld [vmem:[#allocation2 + $0x630] sm:$0xff]
    %v1046 = vld [vmem:[#allocation2 + $0x648] sm:$0xff]
    %v1047 = vld [vmem:[%s2 + $0x4] sm:$0x1]
    %v1048 = vlaneseq
    %v1049 = vshrl.u32 %v1048, 7
    %v1050 = vsub.s32 0, %v1049
    %v1051 = vrot.slane %v1047, %v1050
    %1052 = vmatprep.subr.mxu0 0.0
    %1053 = vmatpush1.msra.mxu0 %v1046
    %1054 = vmatprep.subr.mxu0 0.0
    %1055 = vmatpush1.msra.mxu0 %v1045
    %1056 = vmatprep.subr.mxu0 0.0
    %1057 = vmatpush1.msra.mxu0 %v1044
    %1058 = vmatprep.subr.mxu0 0.0
    %1059 = vmatpush1.msra.mxu0 %v1043
    %1060 = vmatprep.subr.mxu0 0.0
    %1061 = vmatpush1.msra.mxu0 %v1042
    %1062 = vmatprep.subr.mxu0 0.0
    %1063 = vmatpush1.msra.mxu0 %v1041
    %1064 = vmatprep.subr.mxu0 0.0
    %1065 = vmatpush1.msra.mxu0 %v1040
    %1066 = vmatprep.subr.mxu0 0.0
    %1067 = vmatpush1.msra.mxu0 %v1039
    %1068 = vmatprep.subr.mxu0 0.0
    %1069 = vmatpush1.msra.mxu0 %v1038
    %1070 = vmatprep.subr.mxu0 0.0
    %1071 = vmatpush1.msra.mxu0 %v1037
    %1072 = vmatprep.subr.mxu0 0.0
    %1073 = vmatpush1.msra.mxu0 %v1036
    %1074 = vmatprep.subr.mxu0 0.0
    %1075 = vmatpush1.msra.mxu0 %v1035
    %1076 = vmatprep.subr.mxu0 0.0
    %1077 = vmatpush1.msra.mxu0 %v1034
    %1078 = vmatprep.subr.mxu0 0.0
    %1079 = vmatpush1.msra.mxu0 %v1033
    %1080 = vmatprep.subr.mxu0 0.0
    %1081 = vmatpush1.msra.mxu0 %v1032
    %1082 = vmatprep.subr.mxu0 0.0
    %1083 = vmatpush1.msra.mxu0 %v1031
    %1084 = vmatprep.subr.mxu0 0.0
    %1085 = vmatpush2.msra.mxu0 0.0
    %1086 = vmatprep.subr.mxu0 0.0
    %1087 = vmatpush2.msra.mxu0 0.0
    %1088 = vmatprep.subr.mxu0 0.0
    %1089 = vmatpush2.msra.mxu0 0.0
    %1090 = vmatprep.subr.mxu0 0.0
    %1091 = vmatpush2.msra.mxu0 0.0
    %1092 = vmatprep.subr.mxu0 0.0
    %1093 = vmatpush2.msra.mxu0 0.0
    %1094 = vmatprep.subr.mxu0 0.0
    %1095 = vmatpush2.msra.mxu0 0.0
    %1096 = vmatprep.subr.mxu0 0.0
    %1097 = vmatpush2.msra.mxu0 0.0
    %1098 = vmatprep.subr.mxu0 0.0
    %1099 = vmatpush2.msra.mxu0 0.0
    %1100 = vmatprep.subr.mxu0 0.0
    %1101 = vmatpush2.msra.mxu0 0.0
    %1102 = vmatprep.subr.mxu0 0.0
    %1103 = vmatpush2.msra.mxu0 0.0
    %1104 = vmatprep.subr.mxu0 0.0
    %1105 = vmatpush2.msra.mxu0 0.0
    %1106 = vmatprep.subr.mxu0 0.0
    %1107 = vmatpush2.msra.mxu0 0.0
    %1108 = vmatprep.subr.mxu0 0.0
    %1109 = vmatpush2.msra.mxu0 0.0
    %1110 = vmatprep.subr.mxu0 0.0
    %1111 = vmatpush2.msra.mxu0 0.0
    %1112 = vmatprep.subr.mxu0 0.0
    %1113 = vmatpush2.msra.mxu0 0.0
    %1114 = vmatprep.subr.mxu0 0.0
    %1115 = vmatpush2.msra.mxu0 0.0
    %1116 = vmatprep.mubr.f32.mxu0 0.0
    %1117 = vmatmul.mubr.f32.gmra.mxu0 %v1027
    %v1118 = vpop.f32.mrf.mxu0
    %v1119 = vadd.f32 %v1051, %v1118
    %v1120 = vpop.f32.mrf.mxu0
    %1121 = vmatprep.mubr.f32.mxu0 0.0
    %1122 = vmatmul.mubr.f32.gmra.mxu0 %v1028
    %v1123 = vpop.f32.mrf.mxu0
    %v1124 = vadd.f32 %v1051, %v1123
    %v1125 = vpop.f32.mrf.mxu0
    %1126 = vmatprep.mubr.f32.mxu0 0.0
    %1127 = vmatmul.mubr.f32.gmra.mxu0 %v1029
    %v1128 = vpop.f32.mrf.mxu0
    %v1129 = vadd.f32 %v1051, %v1128
    %v1130 = vpop.f32.mrf.mxu0
    %1131 = vmatprep.mubr.f32.mxu0 0.0
    %1132 = vmatmul.mubr.f32.gmra.mxu0 %v1030
    %v1133 = vpop.f32.mrf.mxu0
    %v1134 = vadd.f32 %v1051, %v1133
    %v1135 = vpop.f32.mrf.mxu0
    %1136 = vdwg.mxu0
    %1137 = vst [vmem:[%s3] sm:$0xff] %v1119
    %1138 = vst [vmem:[%s3 + $0x8] sm:$0xff] %v1124
    %1139 = vst [vmem:[%s3 + $0x10] sm:$0xff] %v1129
    %1140 = vst [vmem:[%s3 + $0x18] sm:$0xff] %v1134
    // Predicated region
    $region18: #{decoder_forward.1} parent=1 // pred_check
      _
    $region19: #{decoder_forward.1} parent=1 // pred_check_branch
      %1142 = sbr.rel (0) target = $region21
    $region20: #{decoder_forward.1} parent=1 // pred_region
      _
    $region21: #{decoder_forward.1} parent=1 // pred_fallthru
      _
    // Predicated region
    $region22: #{decoder_forward.1} parent=1 // pred_check
      _
    $region23: #{decoder_forward.1} parent=1 // pred_check_branch
      %1144 = sbr.rel (0) target = $region25
    $region24: #{decoder_forward.1} parent=1 // pred_region
      _
    $region25: #{decoder_forward.1} parent=1 // pred_fallthru
      _
    %1145 = vsyncpa [#allocation3], 1

</llo_original>
